<compile_context>
chip_gen: v7x
topology: tpu7x:2x2x1
jax: 0.10.0
libtpu: 0.0.40
codegen_flags: <defaults>
</compile_context>

<pallas_src>
import functools

import jax
import jax.numpy as jnp
from jax.experimental import pallas as pl
from jax.experimental.pallas import tpu as pltpu


# ----------------------------------------------------------------------------
# Batch-tile selection (per review: never default to bt = B for large B)
# ----------------------------------------------------------------------------
def _pick_batch_tile(B, batch_tile=None):
    if batch_tile is not None:
        bt = min(batch_tile, B)
        if bt != B and bt % 8 != 0:
            bt = max(8, (bt // 8) * 8)          # sublane rule
        return bt
    if B <= 8:
        return B                                # single full block (full-dim rule)
    # >= 2 grid steps so dimension_semantics=("parallel",) can use both v7x
    # TensorCores, capped at 512 rows (measured HBM-roofline sweet spot),
    # multiple of 8; Pallas pads the last partial tile (harmless: linear ops).
    bt = min(512, (B + 1) // 2)
    return max(8, (bt // 8) * 8)


# ----------------------------------------------------------------------------
# Kernel 1: error Hamiltonians, packed (B, 2*N*N) = [Hr | Hi]
# ----------------------------------------------------------------------------
def hamiltonian_kernel(xaug_ref, m_ref, h_ref):
    # One MXU matmul + one unmasked full-width store.
    # TODO(synk): default (exact-f32) Mosaic matmul precision accepted
    # deliberately; revisit bf16 inputs on v6e/v7x only after tolerance checks.
    h_ref[...] = jnp.dot(xaug_ref[...], m_ref[...],
                         preferred_element_type=jnp.float32)


def build_hamiltonians(x_aug, M, *, batch_tile=None):
    B, Dp2 = x_aug.shape
    out_w = M.shape[-1]                                   # 2 * N * N
    bt = _pick_batch_tile(B, batch_tile)
    grid = (pl.cdiv(B, bt),)
    bmap = lambda i: (i, 0)                               # batch-tiled arrays
    cmap = lambda i: (0, 0)                               # constants (resident)
    # TODO(synk): pipeline_mode=pl.Buffered(1) on the constant spec would halve
    # its VMEM footprint (relevant on v7x for large N); skipped at these sizes.
    return pl.pallas_call(
        hamiltonian_kernel,
        grid=grid,
        in_specs=[
            pl.BlockSpec((bt, Dp2), bmap),
            pl.BlockSpec((Dp2, out_w), cmap),
        ],
        out_specs=pl.BlockSpec((bt, out_w), bmap),
        out_shape=jax.ShapeDtypeStruct((B, out_w), jnp.float32),
        compiler_params=pltpu.CompilerParams(dimension_semantics=("parallel",)),
    )(x_aug, M)


# ----------------------------------------------------------------------------
# Kernel 2: pos_k = <psi|A_k|psi>,  wvar = w * sum_k (<psi|A_k^2|psi> - pos_k^2)
# Output packed as (B, 2D+2) = [pos.re | pos.im | wvar.re | wvar.im]
# ----------------------------------------------------------------------------
def pos_wvar_kernel(psi2_ref, f1_ref, r2_ref, g_ref, out_ref, *, D, DN, w):
    psi2 = psi2_ref[...]                                  # (bt, 2N) = [ur | ui]
    dot = lambda a, b: jnp.dot(a, b, preferred_element_type=jnp.float32)

    # Fused complex matmuls via 2x2 real-block embedding (3 matmuls total).
    tu = dot(psi2, f1_ref[...])                           # (bt, 4DN) = [tr|ti|urt|uit]
    s2 = dot(tu[:, :2 * DN], r2_ref[...])                 # (bt, 2DN) = [sr|si]

    tr, ti = tu[:, 0:DN], tu[:, DN:2 * DN]
    ur, ui = tu[:, 2 * DN:3 * DN], tu[:, 3 * DN:4 * DN]
    sr, si = s2[:, 0:DN], s2[:, DN:2 * DN]

    # Pack all four per-k reductions, run through ONE segment-sum matmul whose
    # last two columns already apply w and the sum over k for the e2 terms.
    p = jnp.concatenate([tr * ur - ti * ui,               # Re <psi|A_k|psi> parts
                         tr * ui + ti * ur,               # Im
                         sr * ur - si * ui,               # Re <psi|A_k^2|psi> parts
                         sr * ui + si * ur],              # Im
                        axis=1)                           # (bt, 4DN)
    raw = dot(p, g_ref[...])        # (bt, 2D+2) = [posr | posi | w*Σe2r | w*Σe2i]

    posr = raw[:, 0:D]
    posi = raw[:, D:2 * D]
    cr = w * jnp.sum(posr * posr - posi * posi, axis=1, keepdims=True)
    ci = w * jnp.sum(2.0 * posr * posi, axis=1, keepdims=True)
    zero_head = jnp.zeros((psi2.shape[0], 2 * D), jnp.float32)
    # Single packed store: wvar = w * Σ_k (e2_k - pos_k^2).
    out_ref[...] = raw - jnp.concatenate([zero_head, cr, ci], axis=1)


def pos_and_wvar(psi2, F1, R2, Gp, *, D, w, batch_tile=None):
    B, twoN = psi2.shape
    fourDN = F1.shape[-1]
    DN = fourDN // 4
    out_w = Gp.shape[-1]                                  # 2D + 2
    bt = _pick_batch_tile(B, batch_tile)
    grid = (pl.cdiv(B, bt),)
    bmap = lambda i: (i, 0)
    cmap = lambda i: (0, 0)
    return pl.pallas_call(
        functools.partial(pos_wvar_kernel, D=D, DN=DN, w=float(w)),
        grid=grid,
        in_specs=[
            pl.BlockSpec((bt, twoN), bmap),
            pl.BlockSpec((twoN, fourDN), cmap),
            pl.BlockSpec((2 * DN, 2 * DN), cmap),
            pl.BlockSpec((4 * DN, out_w), cmap),
        ],
        out_specs=pl.BlockSpec((bt, out_w), bmap),
        out_shape=jax.ShapeDtypeStruct((B, out_w), jnp.float32),
        compiler_params=pltpu.CompilerParams(dimension_semantics=("parallel",)),
    )(psi2, F1, R2, Gp)


# ----------------------------------------------------------------------------
# Wrapper helpers (layout plumbing, done once per forward in plain XLA)
# ----------------------------------------------------------------------------
def _block_diag(blocks):
    # (D, N, N) -> (D*N, D*N) with the k-th matrix on the k-th diagonal block
    D, N, _ = blocks.shape
    eyeD = jnp.eye(D, dtype=blocks.dtype)
    return (eyeD[:, None, :, None] * blocks[:, :, None, :]).reshape(D * N, D * N)


def _build_gpack(D, N, w):
    # (4*D*N, 2D+2): segment-sum for posr/posi, w-scaled full sums for e2r/e2i
    DN = D * N
    G = jnp.repeat(jnp.eye(D, dtype=jnp.float32), N, axis=0)     # (DN, D)
    Z = jnp.zeros((DN, D), jnp.float32)
    wcol = jnp.full((DN, 1), w, jnp.float32)
    zcol = jnp.zeros((DN, 1), jnp.float32)
    rows0 = jnp.concatenate([G, Z, zcol, zcol], axis=1)          # posr
    rows1 = jnp.concatenate([Z, G, zcol, zcol], axis=1)          # posi
    rows2 = jnp.concatenate([Z, Z, wcol, zcol], axis=1)          # w * Σ e2r
    rows3 = jnp.concatenate([Z, Z, zcol, wcol], axis=1)          # w * Σ e2i
    return jnp.concatenate([rows0, rows1, rows2, rows3], axis=0)


# ----------------------------------------------------------------------------
# Full forward pass (mirrors QuantumCognitionModel.forward)
# ----------------------------------------------------------------------------
def quantum_cognition_forward(x, Ar, Ai, w, return_intermediates=False,
                              batch_tile=None):
    x = x.astype(jnp.float32)
    B, D = x.shape
    N = Ar.shape[-1]
    NN = N * N
    DN = D * N
    hp = jax.lax.Precision.HIGHEST

    # --- constants for kernel 1 (hoisted out of the batch path) ---
    # S2 = sum_k A_k @ A_k  (D tiny matmuls, once per forward)
    S2r = (jnp.einsum('kij,kjl->il', Ar, Ar, precision=hp)
           - jnp.einsum('kij,kjl->il', Ai, Ai, precision=hp))
    S2i = (jnp.einsum('kij,kjl->il', Ar, Ai, precision=hp)
           + jnp.einsum('kij,kjl->il', Ai, Ar, precision=hp))
    eye_f = jnp.eye(N, dtype=jnp.float32).reshape(NN)
    Mk = jnp.concatenate([-Ar.reshape(D, NN), -Ai.reshape(D, NN)], axis=1)   # (D, 2NN)
    Mi = jnp.concatenate([0.5 * eye_f, jnp.zeros((NN,), jnp.float32)])[None] # (1, 2NN)
    Ms = 0.5 * jnp.concatenate([S2r.reshape(NN), S2i.reshape(NN)])[None]     # (1, 2NN)
    M = jnp.concatenate([Mk, Mi, Ms], axis=0)                                # (D+2, 2NN)
    x_aug = jnp.concatenate(
        [x, jnp.sum(x * x, axis=1, keepdims=True), jnp.ones((B, 1), jnp.float32)],
        axis=1)                                                              # (B, D+2)

    # 1) error Hamiltonians (Pallas kernel 1, one matmul, lane-dense output)
    h_flat = build_hamiltonians(x_aug, M, batch_tile=batch_tile)             # (B, 2NN)
    hr = h_flat[:, :NN].reshape(B, N, N)
    hi = h_flat[:, NN:].reshape(B, N, N)
    H = (hr + 1j * hi).astype(jnp.complex64)

    # 2) eigendecomposition + phase fix (JAX glue; no Pallas eigh primitive)
    # TODO(synk): batched tiny complex eigh in XLA is the end-to-end bottleneck
    # (Amdahl bound on any further kernel-side wins).
    _, evecs = jnp.linalg.eigh(H)                                            # ascending
    v0 = evecs[:, :, 0]                                                      # (B, N)
    phase = jnp.exp(-1j * jnp.angle(v0[:, 0]))[:, None]
    psi0 = phase * v0

    # --- constants for kernel 2 (2x2 real-block embeddings, packed reductions) ---
    Ahr = jnp.transpose(Ar, (1, 0, 2)).reshape(N, DN)       # [A_0 | A_1 | ... ]
    Ahi = jnp.transpose(Ai, (1, 0, 2)).reshape(N, DN)
    E = jnp.tile(jnp.eye(N, dtype=jnp.float32), (1, D))     # (N, DN)
    ZN = jnp.zeros((N, DN), jnp.float32)
    # F1 = [[Ahr, Ahi, E, 0], [Ahi, -Ahr, 0, E]]  -> (2N, 4DN)
    F1 = jnp.concatenate(
        [jnp.concatenate([Ahr, Ahi, E, ZN], axis=1),
         jnp.concatenate([Ahi, -Ahr, ZN, E], axis=1)], axis=0)
    Abdr = _block_diag(Ar)
    Abdi = _block_diag(Ai)
    # TODO(synk): block-diag is D*N^2-sparse; for large D*N replace the dense
    # R2 matmul with a per-k loop / batched dot_general (VMEM + FLOP guard).
    R2 = jnp.concatenate(
        [jnp.concatenate([Abdr, Abdi], axis=1),
         jnp.concatenate([-Abdi, Abdr], axis=1)], axis=0)                    # (2DN, 2DN)
    Gp = _build_gpack(D, N, float(w))                                        # (4DN, 2D+2)

    psi2 = jnp.concatenate([psi0.real, psi0.imag], axis=1).astype(jnp.float32)  # (B, 2N)

    # 3) positions + weighted variances (Pallas kernel 2, single packed output)
    out = pos_and_wvar(psi2, F1, R2, Gp, D=D, w=float(w),
                       batch_tile=batch_tile)                                # (B, 2D+2)
    pos = (out[:, :D] + 1j * out[:, D:2 * D]).astype(jnp.complex64)
    wvar = (out[:, 2 * D] + 1j * out[:, 2 * D + 1]).astype(jnp.complex64)

    if return_intermediates:
        return pos, wvar, H, psi0
    return pos, wvar


if __name__ == "__main__":
    # Small shapes: D data dimensions, N-dim Hilbert space, B batch.
    D, N, B = 3, 8, 4
    w = 0.5

    key = jax.random.PRNGKey(0)
    kwr, kwi, kx = jax.random.split(key, 3)
    # Deterministic "Linear(N, N, dtype=cfloat)" weights, then Hermitianize:
    # A_k = (W_k + W_k^H) / 2  ->  real part symmetric, imag part antisymmetric.
    Wr = 0.3 * jax.random.normal(kwr, (D, N, N), jnp.float32)
    Wi = 0.3 * jax.random.normal(kwi, (D, N, N), jnp.float32)
    Ar = 0.5 * (Wr + jnp.swapaxes(Wr, -1, -2))
    Ai = 0.5 * (Wi - jnp.swapaxes(Wi, -1, -2))
    x = jax.random.normal(kx, (B, D), jnp.float32)

    pos, wvar, H, psi0 = quantum_cognition_forward(x, Ar, Ai, w,
                                                   return_intermediates=True)
    jax.block_until_ready((pos, wvar))

    # --- sanity check against a pure-JAX reference (same psi0) ---
    hp = jax.lax.Precision.HIGHEST
    A = (Ar + 1j * Ai).astype(jnp.complex64)
    I = jnp.eye(N, dtype=jnp.complex64)
    diff = A[None, :, :, :] - x.astype(jnp.complex64)[:, :, None, None] * I
    H_ref = 0.5 * jnp.sum(jnp.matmul(diff, diff, precision=hp), axis=1)
    assert jnp.allclose(H, H_ref, atol=1e-4, rtol=1e-4)

    t = jnp.einsum('bn,knm->bkm', jnp.conj(psi0), A, precision=hp)
    pos_ref = jnp.einsum('bkm,bm->bk', t, psi0, precision=hp)
    e2_ref = jnp.einsum('bkm,kmn,bn->bk', t, A, psi0, precision=hp)
    wvar_ref = w * jnp.sum(e2_ref - pos_ref ** 2, axis=1)
    assert pos.shape == (B, D) and wvar.shape == (B,)
    assert jnp.allclose(pos, pos_ref, atol=1e-4, rtol=1e-4)
    assert jnp.allclose(wvar, wvar_ref, atol=1e-4, rtol=1e-4)

    print("KERNEL_OK")
</pallas_src>

<mosaic_0001>
module attributes {stable_mosaic.version = 11 : i64} {
  func.func @hamiltonian_kernel(%arg0: i32, %arg1: memref<4x5xf32, #tpu.memory_space<vmem>>, %arg2: memref<5x128xf32, #tpu.memory_space<vmem>>, %arg3: memref<4x128xf32, #tpu.memory_space<vmem>>) attributes {dimension_semantics = [#tpu.dimension_semantics<parallel>], iteration_bounds = array<i64: 1>, scalar_prefetch = 0 : i64, scratch_operands = 0 : i64, tpu.core_type = #tpu.core_type<tc>, window_params = [{transform_indices = @transform_0, window_bounds = array<i64: 4, 5>}, {pipeline_mode = #tpu.pipeline_mode<synchronous>, transform_indices = @transform_1, window_bounds = array<i64: 5, 128>}, {transform_indices = @transform_2, window_bounds = array<i64: 4, 128>}]} {
    %c0 = arith.constant 0 : index
    %c0_0 = arith.constant 0 : index
    %0 = vector.load %arg1[%c0, %c0_0] : memref<4x5xf32, #tpu.memory_space<vmem>>, vector<4x5xf32>
    %c0_1 = arith.constant 0 : index
    %c0_2 = arith.constant 0 : index
    %1 = vector.load %arg2[%c0_1, %c0_2] : memref<5x128xf32, #tpu.memory_space<vmem>>, vector<5x128xf32>
    %cst = arith.constant dense<0.000000e+00> : vector<4x128xf32>
    %2 = tpu.matmul %0, %1, %cst {dimension_numbers = #tpu.dot_dimension_numbers<[1], [0], [0], [1], [0, 0, 1, 1], [], []>} : vector<4x5xf32>, vector<5x128xf32>, vector<4x128xf32> -> vector<4x128xf32>
    %c0_3 = arith.constant 0 : index
    %c0_4 = arith.constant 0 : index
    %3 = vector.load %arg3[%c0_3, %c0_4] : memref<4x128xf32, #tpu.memory_space<vmem>>, vector<4x128xf32>
    tpu.vector_store %arg3[%c0_3, %c0_4], %2 {strides = array<i32>} : memref<4x128xf32, #tpu.memory_space<vmem>>, vector<4x128xf32>,
    return
  }
  func.func @transform_0(%arg0: i32) -> (i32, i32) {
    %c0_i32 = arith.constant 0 : i32
    %c0_i32_0 = arith.constant 0 : i32
    return %arg0, %c0_i32 : i32, i32
  }
  func.func @transform_1(%arg0: i32) -> (i32, i32) {
    %c0_i32 = arith.constant 0 : i32
    %c0_i32_0 = arith.constant 0 : i32
    %c0_i32_1 = arith.constant 0 : i32
    return %c0_i32, %c0_i32_0 : i32, i32
  }
  func.func @transform_2(%arg0: i32) -> (i32, i32) {
    %c0_i32 = arith.constant 0 : i32
    %c0_i32_0 = arith.constant 0 : i32
    return %arg0, %c0_i32 : i32, i32
  }
}

</mosaic_0001>

<llo_original>
// kernel: tpu_custom_call.1
$region0: #{tpu_custom_call.1}
  #allocation0 [shape = 'u32[]', space=smem, size = 0x4, offset = 0x4, fixed_abs, tag = 'smem constant byte address 0x4 - core index']
  #allocation1 [shape = 'u32[144,128]{1,0:T(1,128)}', space=vmem, size = 0x12000, scoped, tag = 'internal scratch']
  %s0 = inlined_call_operand.hbm [shape: f32[4,5], index: 0, kind: input, shape index: {}]
  %s1 = inlined_call_operand.hbm [shape: f32[5,128], index: 1, kind: input, shape index: {}]
  %s2 = inlined_call_operand.hbm [shape: f32[4,128], index: 2, kind: output, shape index: {}]
  %s3 = sld [smem:[#allocation0]]
  $region26: #{tpu_custom_call.1} parent=0
    _
  %s5 = ssub.s32 1, %s3
  %s6 = scalar_select 0, %s5, %s3
  $region1: #{tpu_custom_call.1} parent=0
    #allocation2 [shape = 'u8[2048]{0}', space=vmem, size = 0x800, scoped, tag = 'input window, operand 0, single buffered']
    #allocation3 [shape = 's32[1]{0}', space=sflag, size = 0x4, scoped, tag = 'scoped memory for tpu_custom_call.1']
    #allocation4 [shape = 's32[1]{0}', space=sflag, size = 0x4, scoped, tag = 'scoped memory for tpu_custom_call.1']
    #allocation5 [shape = 'u8[4096]{0}', space=vmem, size = 0x1000, scoped, tag = 'input window, operand 1, single buffered']
    #allocation6 [shape = 's32[1]{0}', space=sflag, size = 0x4, scoped, tag = 'scoped memory for tpu_custom_call.1']
    #allocation7 [shape = 'u8[2048]{0}', space=vmem, size = 0x800, scoped, tag = 'output window, operand 0, single buffered']
    %7 = vsyncpa [#allocation3], 0
    %8 = vsyncpa [#allocation6], 0
    %9 = vsyncpa [#allocation4], 0
    // Predicated region
    $region2: #{tpu_custom_call.1} parent=1 // pred_check
      _
    $region3: #{tpu_custom_call.1} parent=1 // pred_check_branch
      %11 = sbr.rel (0) target = $region5
    $region4: #{tpu_custom_call.1} parent=1 // pred_region
      %s13 = ssub.s32 64, 64
      %14 = vsyncadd [#allocation3], %s13
      %s16 = sshll.u32 [#allocation2], 4
      %s17 = int_to_ptr.vmem [resolvable:$true] %s16
      %19 = dma.hbm_to_vmem [thread:$0]  %s0, 64, %s17, [#allocation3]
    $region5: #{tpu_custom_call.1} parent=1 // pred_fallthru
      _
    // Predicated region
    $region6: #{tpu_custom_call.1} parent=1 // pred_check
      _
    $region7: #{tpu_custom_call.1} parent=1 // pred_check_branch
      %21 = sbr.rel (0) target = $region9
    $region8: #{tpu_custom_call.1} parent=1 // pred_region
      %s23 = ssub.s32 128, 128
      %24 = vsyncadd [#allocation6], %s23
      %s26 = sshll.u32 [#allocation5], 4
      %s27 = int_to_ptr.vmem [resolvable:$true] %s26
      %29 = dma.hbm_to_vmem [thread:$0]  %s1, 128, %s27, [#allocation6]
    $region9: #{tpu_custom_call.1} parent=1 // pred_fallthru
      _
    // Predicated region
    $region10: #{tpu_custom_call.1} parent=1 // pred_check
      _
    $region11: #{tpu_custom_call.1} parent=1 // pred_check_branch
      %31 = sbr.rel (0) target = $region13
    $region12: #{tpu_custom_call.1} parent=1 // pred_region
      %32 = dma.done [#allocation3], 64
    $region13: #{tpu_custom_call.1} parent=1 // pred_fallthru
      _
    // Predicated region
    $region14: #{tpu_custom_call.1} parent=1 // pred_check
      _
    $region15: #{tpu_custom_call.1} parent=1 // pred_check_branch
      %34 = sbr.rel (0) target = $region17
    $region16: #{tpu_custom_call.1} parent=1 // pred_region
      %35 = dma.done [#allocation6], 128
    $region17: #{tpu_custom_call.1} parent=1 // pred_fallthru
      _
    %v36 = vld [vmem:[#allocation2] sm:$0xf]
    %v37 = vld [vmem:[#allocation5] sm:$0x1f]
    %vm38 = vcmask 39936
    %v40 = vsel %vm38, %v36, 0
    %vm42 = vcmask 1044480
    %v44 = vsel %vm42, %v37, 0
    %46 = vmatprep.subr.mxu0 0.0
    %47 = vmatpush1.msra.mxu0 %v44
    %48 = vmatprep.subr.mxu0 0.0
    %49 = vmatpush1.msra.mxu0 0.0
    %50 = vmatprep.subr.mxu0 0.0
    %51 = vmatpush1.msra.mxu0 0.0
    %52 = vmatprep.subr.mxu0 0.0
    %53 = vmatpush1.msra.mxu0 0.0
    %54 = vmatprep.subr.mxu0 0.0
    %55 = vmatpush1.msra.mxu0 0.0
    %56 = vmatprep.subr.mxu0 0.0
    %57 = vmatpush1.msra.mxu0 0.0
    %58 = vmatprep.subr.mxu0 0.0
    %59 = vmatpush1.msra.mxu0 0.0
    %60 = vmatprep.subr.mxu0 0.0
    %61 = vmatpush1.msra.mxu0 0.0
    %62 = vmatprep.subr.mxu0 0.0
    %63 = vmatpush1.msra.mxu0 0.0
    %64 = vmatprep.subr.mxu0 0.0
    %65 = vmatpush1.msra.mxu0 0.0
    %66 = vmatprep.subr.mxu0 0.0
    %67 = vmatpush1.msra.mxu0 0.0
    %68 = vmatprep.subr.mxu0 0.0
    %69 = vmatpush1.msra.mxu0 0.0
    %70 = vmatprep.subr.mxu0 0.0
    %71 = vmatpush1.msra.mxu0 0.0
    %72 = vmatprep.subr.mxu0 0.0
    %73 = vmatpush1.msra.mxu0 0.0
    %74 = vmatprep.subr.mxu0 0.0
    %75 = vmatpush1.msra.mxu0 0.0
    %76 = vmatprep.subr.mxu0 0.0
    %77 = vmatpush1.msra.mxu0 0.0
    %78 = vmatprep.subr.mxu0 0.0
    %79 = vmatpush1.msra.mxu0 0.0
    %80 = vmatprep.subr.mxu0 0.0
    %81 = vmatpush1.msra.mxu0 0.0
    %82 = vmatprep.subr.mxu0 0.0
    %83 = vmatpush1.msra.mxu0 0.0
    %84 = vmatprep.subr.mxu0 0.0
    %85 = vmatpush1.msra.mxu0 0.0
    %86 = vmatprep.subr.mxu0 0.0
    %87 = vmatpush1.msra.mxu0 0.0
    %88 = vmatprep.subr.mxu0 0.0
    %89 = vmatpush1.msra.mxu0 0.0
    %90 = vmatprep.subr.mxu0 0.0
    %91 = vmatpush1.msra.mxu0 0.0
    %92 = vmatprep.subr.mxu0 0.0
    %93 = vmatpush1.msra.mxu0 0.0
    %94 = vmatprep.subr.mxu0 0.0
    %95 = vmatpush1.msra.mxu0 0.0
    %96 = vmatprep.subr.mxu0 0.0
    %97 = vmatpush1.msra.mxu0 0.0
    %98 = vmatprep.subr.mxu0 0.0
    %99 = vmatpush1.msra.mxu0 0.0
    %100 = vmatprep.subr.mxu0 0.0
    %101 = vmatpush1.msra.mxu0 0.0
    %102 = vmatprep.subr.mxu0 0.0
    %103 = vmatpush1.msra.mxu0 0.0
    %104 = vmatprep.subr.mxu0 0.0
    %105 = vmatpush1.msra.mxu0 0.0
    %106 = vmatprep.subr.mxu0 0.0
    %107 = vmatpush1.msra.mxu0 0.0
    %108 = vmatprep.subr.mxu0 0.0
    %109 = vmatpush1.msra.mxu0 0.0
    %110 = vmatprep.mubr.f32.mxu0 0.0
    %111 = vmatmul.mubr.f32.gmra.mrb[0].mxu0 %v40
    %v112 = vpop.f32.mrb[0].mxu0
    %v113 = vadd.f32 0.0, %v112
    %v114 = vpop.f32.mrb[0].mxu0
    %115 = vdwg.mxu0
    %116 = vst [vmem:[#allocation7] sm:$0xf] %v113
    // Predicated region
    $region18: #{tpu_custom_call.1} parent=1 // pred_check
      _
    $region19: #{tpu_custom_call.1} parent=1 // pred_check_branch
      %118 = sbr.rel (0) target = $region21
    $region20: #{tpu_custom_call.1} parent=1 // pred_region
      %s120 = ssub.s32 64, 64
      %121 = vsyncadd [#allocation4], %s120
      %s123 = sshll.u32 [#allocation7], 4
      %s124 = int_to_ptr.vmem [resolvable:$true] %s123
      %126 = dma.vmem_to_hbm [thread:$0]  %s124, 64, %s2, [#allocation4]
    $region21: #{tpu_custom_call.1} parent=1 // pred_fallthru
      _
    // Predicated region
    $region22: #{tpu_custom_call.1} parent=1 // pred_check
      _
    $region23: #{tpu_custom_call.1} parent=1 // pred_check_branch
      %128 = sbr.rel (0) target = $region25
    $region24: #{tpu_custom_call.1} parent=1 // pred_region
      %129 = dma.done [#allocation4], 64
    $region25: #{tpu_custom_call.1} parent=1 // pred_fallthru
      _
    %130 = vsyncpa [#allocation3], 1
    %131 = vsyncpa [#allocation6], 1
    %132 = vsyncpa [#allocation4], 1

</llo_original>
